<compile_context>
chip_gen: v6e
topology: v6e:2x2x1
jax: 0.10.0
libtpu: 0.0.40
codegen_flags: <defaults>
</compile_context>

<pallas_src>
from typing import Dict, List, Optional, Tuple

import jax
import jax.numpy as jnp
from jax import lax
from jax.experimental import pallas as pl
from jax.experimental.pallas import tpu as pltpu


def _round_up(x: int, m: int) -> int:
    return ((x + m - 1) // m) * m


# ---------------------------------------------------------------------------
# Pallas kernel: fused SAGE layer for one node tile
#   (root matmul + K-flattened neighbor matmul + bias + LayerNorm + ReLU)
# ---------------------------------------------------------------------------
def _sage_layer_kernel(tid_ref, x_ref, agg_ref, wr_ref, wl_ref, b_ref, g_ref, bt_ref, o_ref):
    # tid_ref : [num_blocks] int32 (SMEM scalar prefetch) -- node-type id of each block
    # x_ref   : [TN, C]          bf16  current features of this node tile
    # agg_ref : [TN, E_max*C]    bf16  mean-aggregated messages, edge-type slots along K
    # wr_ref  : [T, C, C]        bf16  (sum_e W_r_e)^T per node type        (VMEM resident)
    # wl_ref  : [T, E_max*C, C]  bf16  stacked W_l_e^T per node type        (VMEM resident)
    # b_ref   : [T, 1, C]        f32   combined bias per node type
    # g_ref   : [T, 1, C]        f32   LayerNorm gamma
    # bt_ref  : [T, 1, C]        f32   LayerNorm beta
    # o_ref   : [TN, C]          bf16
    t = tid_ref[pl.program_id(0)]

    acc = jnp.dot(x_ref[...], wr_ref[t], preferred_element_type=jnp.float32)
    acc = acc + jnp.dot(agg_ref[...], wl_ref[t], preferred_element_type=jnp.float32)
    acc = acc + b_ref[t]

    # LayerNorm (mode='node') over the channel (lane) axis in f32, then ReLU.
    mean = jnp.mean(acc, axis=-1, keepdims=True)
    xc = acc - mean
    var = jnp.mean(xc * xc, axis=-1, keepdims=True)
    y = xc * lax.rsqrt(var + 1e-5) * g_ref[t] + bt_ref[t]
    o_ref[...] = jnp.maximum(y, 0.0).astype(o_ref.dtype)


def _fused_layer_call(tid, x_slab, agg_slab, wr, wl, b, gamma, beta, *,
                      tile_n, channels, e_max, num_types):
    num_blocks = int(tid.shape[0])
    C = channels
    T = num_types
    n_tot = num_blocks * tile_n

    # Rough VMEM working set: double-buffered activation streams + resident weight stacks.
    est = (2 * tile_n * C * 2            # x (bf16, 2 buffers)
           + 2 * tile_n * e_max * C * 2  # agg
           + 2 * tile_n * C * 2          # out
           + 2 * T * C * C * 2           # wr stack
           + 2 * T * e_max * C * C * 2   # wl stack
           + 6 * T * C * 4)              # bias / gamma / beta
    vmem_limit = int(min(max(2 * est, 16 << 20), 48 << 20))

    return pl.pallas_call(
        _sage_layer_kernel,
        out_shape=jax.ShapeDtypeStruct((n_tot, C), jnp.bfloat16),
        grid_spec=pltpu.PrefetchScalarGridSpec(
            num_scalar_prefetch=1,
            grid=(num_blocks,),
            in_specs=[
                pl.BlockSpec((tile_n, C), lambda i, t: (i, 0)),           # x tile
                pl.BlockSpec((tile_n, e_max * C), lambda i, t: (i, 0)),   # agg tile (K-flat)
                pl.BlockSpec((T, C, C), lambda i, t: (0, 0, 0)),          # wr (whole stack)
                pl.BlockSpec((T, e_max * C, C), lambda i, t: (0, 0, 0)),  # wl (whole stack)
                pl.BlockSpec((T, 1, C), lambda i, t: (0, 0, 0)),          # bias
                pl.BlockSpec((T, 1, C), lambda i, t: (0, 0, 0)),          # gamma
                pl.BlockSpec((T, 1, C), lambda i, t: (0, 0, 0)),          # beta
            ],
            out_specs=pl.BlockSpec((tile_n, C), lambda i, t: (i, 0)),
        ),
        compiler_params=pltpu.CompilerParams(
            dimension_semantics=("parallel",),
            vmem_limit_bytes=vmem_limit,
        ),
    )(tid, x_slab, agg_slab, wr, wl, b, gamma, beta)


# ---------------------------------------------------------------------------
# Graph glue used by the pure-JAX reference (f32)
# ---------------------------------------------------------------------------
def _segment_mean(x_src, edge_index, num_dst):
    src = edge_index[0]
    dst = edge_index[1]
    msg = jnp.take(x_src, src, axis=0)
    sums = jax.ops.segment_sum(msg, dst, num_segments=num_dst)
    cnt = jax.ops.segment_sum(jnp.ones((src.shape[0],), jnp.float32), dst, num_segments=num_dst)
    return sums / jnp.maximum(cnt, 1.0)[:, None]


# ---------------------------------------------------------------------------
# Module
# ---------------------------------------------------------------------------
class HeteroGraphSAGEPallas:
    """Pallas port of relbench.modeling.nn.HeteroGraphSAGE (aggr='mean')."""

    def __init__(self, node_types: List[str], edge_types: List[Tuple[str, str, str]],
                 channels: int, aggr: str = "mean", num_layers: int = 2, *,
                 key, tile_n: int = 256):
        assert aggr == "mean"
        self.node_types = list(node_types)
        self.edge_types = list(edge_types)
        self.channels = channels
        self.num_layers = num_layers
        self.tile_n = max(8, _round_up(tile_n, 8))   # tunable; sweep {128,256,512,1024}

        # Fixed edge-type slot assignment per destination node type.
        self.dst_edge_types = {nt: [et for et in self.edge_types if et[2] == nt]
                               for nt in self.node_types}
        for nt in self.node_types:
            assert len(self.dst_edge_types[nt]) > 0, (
                f"node type {nt!r} has no incoming edge type")
        self.e_max = max(len(v) for v in self.dst_edge_types.values())

        C = channels
        limit = (6.0 / (C + C)) ** 0.5
        self.raw_params = []      # per-layer raw params (pure-JAX f32 reference)
        self.layer_params = []    # per-layer pre-combined / transposed / stacked params

        for _ in range(num_layers):
            raw_conv = {}
            for et in self.edge_types:
                key, k1, k2, k3 = jax.random.split(key, 4)
                raw_conv[et] = dict(
                    w_l=jax.random.uniform(k1, (C, C), jnp.float32, -limit, limit),
                    w_r=jax.random.uniform(k2, (C, C), jnp.float32, -limit, limit),
                    b_l=jax.random.uniform(k3, (C,), jnp.float32, -0.1, 0.1),
                )
            raw_norm = {}
            for nt in self.node_types:
                key, k1, k2 = jax.random.split(key, 3)
                raw_norm[nt] = dict(
                    gamma=1.0 + 0.1 * jax.random.normal(k1, (C,), jnp.float32),
                    beta=0.1 * jax.random.normal(k2, (C,), jnp.float32),
                )
            self.raw_params.append(dict(conv=raw_conv, norm=raw_norm))

            # Hoisted weight prep: per dst type combine root weights & biases across its
            # edge types, transpose once, stack the per-slot W_l^T blocks along K, and
            # stack everything over node types for the fused per-layer call.
            wr_all, wl_all, b_all, g_all, bt_all = [], [], [], [], []
            for nt in self.node_types:
                ets = self.dst_edge_types[nt]
                wl_blocks = [raw_conv[et]["w_l"].T for et in ets]
                # TODO(synk): zero slots for types with < e_max incoming edge types still
                # cost DMA/MXU work; a per-slot-count grouped call would avoid it.
                wl_blocks += [jnp.zeros((C, C), jnp.float32)] * (self.e_max - len(ets))
                wr = jnp.zeros((C, C), jnp.float32)
                b = jnp.zeros((C,), jnp.float32)
                for et in ets:
                    wr = wr + raw_conv[et]["w_r"]
                    b = b + raw_conv[et]["b_l"]
                wl_all.append(jnp.concatenate(wl_blocks, axis=0))   # [E_max*C, C]
                wr_all.append(wr.T)                                  # [C, C]
                b_all.append(b.reshape(1, C))
                g_all.append(raw_norm[nt]["gamma"].reshape(1, C))
                bt_all.append(raw_norm[nt]["beta"].reshape(1, C))
            self.layer_params.append(dict(
                wr=jnp.stack(wr_all).astype(jnp.bfloat16),           # [T, C, C]
                wl=jnp.stack(wl_all).astype(jnp.bfloat16),           # [T, E_max*C, C]
                b=jnp.stack(b_all),                                  # [T, 1, C] f32
                gamma=jnp.stack(g_all),                              # [T, 1, C] f32
                beta=jnp.stack(bt_all),                              # [T, 1, C] f32
            ))

    def __call__(
        self,
        x_dict: Dict[str, jnp.ndarray],
        edge_index_dict: Dict[Tuple[str, str, str], jnp.ndarray],
        num_sampled_nodes_dict: Optional[Dict[str, List[int]]] = None,
        num_sampled_edges_dict: Optional[Dict[Tuple[str, str, str], List[int]]] = None,
    ) -> Dict[str, jnp.ndarray]:
        C = self.channels
        nts = self.node_types
        n_sizes = {nt: int(x_dict[nt].shape[0]) for nt in nts}

        # Node-tile size (clamped so tiny batches don't over-pad).
        tile_n = min(self.tile_n, _round_up(max(n_sizes.values()), 8))

        # Fixed per-type row offsets into the packed slab, held for the whole forward pass.
        offsets, tids = {}, []
        off = 0
        for t, nt in enumerate(nts):
            offsets[nt] = off
            n_pad = _round_up(n_sizes[nt], tile_n)
            tids.extend([t] * (n_pad // tile_n))
            off += n_pad
        n_tot = off
        tid = jnp.asarray(tids, jnp.int32)

        # Pack activations once (bf16, lane-dense C) -- not repeated per layer.
        pieces = []
        for nt in nts:
            n = n_sizes[nt]
            n_pad = _round_up(n, tile_n)
            pieces.append(jnp.pad(x_dict[nt].astype(jnp.bfloat16), ((0, n_pad - n), (0, 0))))
        x_slab = jnp.concatenate(pieces, axis=0)                     # [n_tot, C]

        # Global gather/scatter indices over the packed slab (built once, reused per layer).
        src_list, seg_list = [], []
        for nt in nts:
            for slot, et in enumerate(self.dst_edge_types[nt]):
                ei = edge_index_dict[et]
                src_list.append(ei[0].astype(jnp.int32) + offsets[et[0]])
                seg_list.append((ei[1].astype(jnp.int32) + offsets[nt]) * self.e_max + slot)
        g_src = jnp.concatenate(src_list)
        seg = jnp.concatenate(seg_list)
        n_seg = n_tot * self.e_max
        cnt = jax.ops.segment_sum(jnp.ones(g_src.shape, jnp.float32), seg, num_segments=n_seg)
        inv_cnt = 1.0 / jnp.maximum(cnt, 1.0)

        for layer in range(self.num_layers):
            p = self.layer_params[layer]

            # Graph glue (XLA): gather + scatter-mean directly into the packed agg slab.
            # TODO(synk): data-dependent scatter-mean has no clean rectangular Pallas
            # equivalent without pre-sorting edges by destination; kept in XLA.
            msg = jnp.take(x_slab, g_src, axis=0).astype(jnp.float32)
            agg = jax.ops.segment_sum(msg, seg, num_segments=n_seg)
            agg = (agg * inv_cnt[:, None]).astype(jnp.bfloat16)
            agg = agg.reshape(n_tot, self.e_max * C)                 # slots concatenated on K

            # One fused bf16 Pallas call per layer; its output is the next layer's x slab.
            x_slab = _fused_layer_call(
                tid, x_slab, agg,
                p["wr"], p["wl"], p["b"], p["gamma"], p["beta"],
                tile_n=tile_n, channels=C, e_max=self.e_max, num_types=len(nts))

        # Unpack once at the very end.
        return {nt: x_slab[offsets[nt]:offsets[nt] + n_sizes[nt]] for nt in nts}


# ---------------------------------------------------------------------------
# Pure-JAX f32 reference (uses the raw per-edge-type params, independent of packing)
# ---------------------------------------------------------------------------
def _reference_forward(model, x_dict, edge_index_dict):
    C = model.channels
    for layer in range(model.num_layers):
        raw = model.raw_params[layer]
        new_x = {}
        for nt in model.node_types:
            n_dst = x_dict[nt].shape[0]
            acc = jnp.zeros((n_dst, C), jnp.float32)
            for et in model.dst_edge_types[nt]:
                p = raw["conv"][et]
                agg = _segment_mean(x_dict[et[0]], edge_index_dict[et], n_dst)
                acc = acc + agg @ p["w_l"].T + p["b_l"] + x_dict[nt] @ p["w_r"].T
            ln = raw["norm"][nt]
            mean = acc.mean(-1, keepdims=True)
            var = ((acc - mean) ** 2).mean(-1, keepdims=True)
            y = (acc - mean) / jnp.sqrt(var + 1e-5) * ln["gamma"] + ln["beta"]
            new_x[nt] = jnp.maximum(y, 0.0)
        x_dict = new_x
    return x_dict


if __name__ == "__main__":
    channels = 128          # lane-dense channel width
    node_types = ["user", "item"]
    edge_types = [
        ("user", "rates", "item"),
        ("item", "rev_rates", "user"),
        ("user", "follows", "user"),
    ]
    sizes = {"user": 64, "item": 96}
    n_edges = {edge_types[0]: 256, edge_types[1]: 256, edge_types[2]: 128}

    key = jax.random.PRNGKey(0)
    key, mk = jax.random.split(key)
    model = HeteroGraphSAGEPallas(node_types, edge_types, channels,
                                  aggr="mean", num_layers=2, key=mk, tile_n=256)

    keys = jax.random.split(jax.random.PRNGKey(0), 8)
    x_dict = {
        "user": jax.random.normal(keys[0], (sizes["user"], channels), jnp.float32),
        "item": jax.random.normal(keys[1], (sizes["item"], channels), jnp.float32),
    }
    edge_index_dict = {}
    for i, et in enumerate(edge_types):
        s, _, d = et
        ks, kd = jax.random.split(keys[2 + i])
        src = jax.random.randint(ks, (n_edges[et],), 0, sizes[s]).astype(jnp.int32)
        dst = jax.random.randint(kd, (n_edges[et],), 0, sizes[d]).astype(jnp.int32)
        edge_index_dict[et] = jnp.stack([src, dst])

    out_dict = model(x_dict, edge_index_dict)
    for nt, out in out_dict.items():
        jax.block_until_ready(out)
        assert out.shape == (sizes[nt], channels), (nt, out.shape)
        assert out.dtype == jnp.bfloat16

    ref_dict = _reference_forward(model, x_dict, edge_index_dict)
    for nt in node_types:
        got = out_dict[nt].astype(jnp.float32)
        ref = ref_dict[nt]
        # bf16 activations/weights end-to-end -> relaxed tolerance vs the f32 reference.
        assert jnp.allclose(got, ref, atol=5e-2, rtol=5e-2), (
            nt, float(jnp.max(jnp.abs(got - ref))))

    print("KERNEL_OK")
</pallas_src>

<mosaic_0001>
module attributes {stable_mosaic.version = 11 : i64} {
  func.func @_sage_layer_kernel(%arg0: i32, %arg1: memref<2xi32, #tpu.memory_space<smem>>, %arg2: memref<96x128xbf16, #tpu.memory_space<vmem>>, %arg3: memref<96x256xbf16, #tpu.memory_space<vmem>>, %arg4: memref<2x128x128xbf16, #tpu.memory_space<vmem>>, %arg5: memref<2x256x128xbf16, #tpu.memory_space<vmem>>, %arg6: memref<2x1x128xf32, #tpu.memory_space<vmem>>, %arg7: memref<2x1x128xf32, #tpu.memory_space<vmem>>, %arg8: memref<2x1x128xf32, #tpu.memory_space<vmem>>, %arg9: memref<96x128xbf16, #tpu.memory_space<vmem>>) attributes {dimension_semantics = [#tpu.dimension_semantics<parallel>], iteration_bounds = array<i64: 2>, scalar_prefetch = 1 : i64, scratch_operands = 0 : i64, tpu.core_type = #tpu.core_type<tc>, window_params = [{transform_indices = @transform_0, window_bounds = array<i64: 96, 128>}, {transform_indices = @transform_1, window_bounds = array<i64: 96, 256>}, {pipeline_mode = #tpu.pipeline_mode<synchronous>, transform_indices = @transform_2, window_bounds = array<i64: 2, 128, 128>}, {pipeline_mode = #tpu.pipeline_mode<synchronous>, transform_indices = @transform_3, window_bounds = array<i64: 2, 256, 128>}, {pipeline_mode = #tpu.pipeline_mode<synchronous>, transform_indices = @transform_4, window_bounds = array<i64: 2, 1, 128>}, {pipeline_mode = #tpu.pipeline_mode<synchronous>, transform_indices = @transform_5, window_bounds = array<i64: 2, 1, 128>}, {pipeline_mode = #tpu.pipeline_mode<synchronous>, transform_indices = @transform_6, window_bounds = array<i64: 2, 1, 128>}, {transform_indices = @transform_7, window_bounds = array<i64: 96, 128>}]} {
    %0 = arith.index_cast %arg0 : i32 to index
    %1 = memref.load %arg1[%0] : memref<2xi32, #tpu.memory_space<smem>>
    %c0 = arith.constant 0 : index
    %c0_0 = arith.constant 0 : index
    %2 = vector.load %arg2[%c0, %c0_0] : memref<96x128xbf16, #tpu.memory_space<vmem>>, vector<96x128xbf16>
    %3 = arith.index_cast %1 : i32 to index
    %c0_1 = arith.constant 0 : index
    %c0_2 = arith.constant 0 : index
    %4 = vector.load %arg4[%3, %c0_1, %c0_2] : memref<2x128x128xbf16, #tpu.memory_space<vmem>>, vector<1x128x128xbf16>
    %5 = vector.shape_cast %4 : vector<1x128x128xbf16> to vector<128x128xbf16>
    %cst = arith.constant dense<0.000000e+00> : vector<96x128xf32>
    %6 = tpu.matmul %2, %5, %cst {dimension_numbers = #tpu.dot_dimension_numbers<[1], [0], [0], [1], [0, 0, 1, 1], [], []>} : vector<96x128xbf16>, vector<128x128xbf16>, vector<96x128xf32> -> vector<96x128xf32>
    %c0_3 = arith.constant 0 : index
    %c0_4 = arith.constant 0 : index
    %7 = vector.load %arg3[%c0_3, %c0_4] : memref<96x256xbf16, #tpu.memory_space<vmem>>, vector<96x256xbf16>
    %8 = arith.index_cast %1 : i32 to index
    %c0_5 = arith.constant 0 : index
    %c0_6 = arith.constant 0 : index
    %9 = vector.load %arg5[%8, %c0_5, %c0_6] : memref<2x256x128xbf16, #tpu.memory_space<vmem>>, vector<1x256x128xbf16>
    %10 = vector.shape_cast %9 : vector<1x256x128xbf16> to vector<256x128xbf16>
    %cst_7 = arith.constant dense<0.000000e+00> : vector<96x128xf32>
    %11 = tpu.matmul %7, %10, %cst_7 {dimension_numbers = #tpu.dot_dimension_numbers<[1], [0], [0], [1], [0, 0, 1, 1], [], []>} : vector<96x256xbf16>, vector<256x128xbf16>, vector<96x128xf32> -> vector<96x128xf32>
    %12 = arith.addf %6, %11 : vector<96x128xf32>
    %13 = arith.index_cast %1 : i32 to index
    %c0_8 = arith.constant 0 : index
    %c0_9 = arith.constant 0 : index
    %14 = vector.load %arg6[%13, %c0_8, %c0_9] : memref<2x1x128xf32, #tpu.memory_space<vmem>>, vector<1x1x128xf32>
    %15 = vector.shape_cast %14 : vector<1x1x128xf32> to vector<1x128xf32>
    %16 = vector.broadcast %15 : vector<1x128xf32> to vector<96x128xf32>
    %17 = arith.addf %12, %16 : vector<96x128xf32>
    %cst_10 = arith.constant dense<0.000000e+00> : vector<96xf32>
    %18 = vector.multi_reduction <add>, %17, %cst_10 [1] : vector<96x128xf32> to vector<96xf32>
    %19 = vector.shape_cast %18 : vector<96xf32> to vector<96x1xf32>
    %cst_11 = arith.constant 1.280000e+02 : f32
    %20 = vector.broadcast %cst_11 : f32 to vector<96x1xf32>
    %21 = arith.divf %19, %20 : vector<96x1xf32>
    %22 = vector.broadcast %21 : vector<96x1xf32> to vector<96x128xf32>
    %23 = arith.subf %17, %22 : vector<96x128xf32>
    %24 = arith.mulf %23, %23 : vector<96x128xf32>
    %cst_12 = arith.constant dense<0.000000e+00> : vector<96xf32>
    %25 = vector.multi_reduction <add>, %24, %cst_12 [1] : vector<96x128xf32> to vector<96xf32>
    %26 = vector.shape_cast %25 : vector<96xf32> to vector<96x1xf32>
    %cst_13 = arith.constant 1.280000e+02 : f32
    %27 = vector.broadcast %cst_13 : f32 to vector<96x1xf32>
    %28 = arith.divf %26, %27 : vector<96x1xf32>
    %cst_14 = arith.constant 9.99999974E-6 : f32
    %29 = vector.broadcast %cst_14 : f32 to vector<96x1xf32>
    %30 = arith.addf %28, %29 : vector<96x1xf32>
    %31 = math.rsqrt %30 : vector<96x1xf32>
    %32 = vector.broadcast %31 : vector<96x1xf32> to vector<96x128xf32>
    %33 = arith.mulf %23, %32 : vector<96x128xf32>
    %34 = arith.index_cast %1 : i32 to index
    %c0_15 = arith.constant 0 : index
    %c0_16 = arith.constant 0 : index
    %35 = vector.load %arg7[%34, %c0_15, %c0_16] : memref<2x1x128xf32, #tpu.memory_space<vmem>>, vector<1x1x128xf32>
    %36 = vector.shape_cast %35 : vector<1x1x128xf32> to vector<1x128xf32>
    %37 = vector.broadcast %36 : vector<1x128xf32> to vector<96x128xf32>
    %38 = arith.mulf %33, %37 : vector<96x128xf32>
    %39 = arith.index_cast %1 : i32 to index
    %c0_17 = arith.constant 0 : index
    %c0_18 = arith.constant 0 : index
    %40 = vector.load %arg8[%39, %c0_17, %c0_18] : memref<2x1x128xf32, #tpu.memory_space<vmem>>, vector<1x1x128xf32>
    %41 = vector.shape_cast %40 : vector<1x1x128xf32> to vector<1x128xf32>
    %42 = vector.broadcast %41 : vector<1x128xf32> to vector<96x128xf32>
    %43 = arith.addf %38, %42 : vector<96x128xf32>
    %cst_19 = arith.constant 0.000000e+00 : f32
    %44 = vector.broadcast %cst_19 : f32 to vector<96x128xf32>
    %45 = arith.maximumf %43, %44 : vector<96x128xf32>
    %46 = arith.truncf %45 : vector<96x128xf32> to vector<96x128xbf16>
    %c0_20 = arith.constant 0 : index
    %c0_21 = arith.constant 0 : index
    %47 = vector.load %arg9[%c0_20, %c0_21] : memref<96x128xbf16, #tpu.memory_space<vmem>>, vector<96x128xbf16>
    tpu.vector_store %arg9[%c0_20, %c0_21], %46 {strides = array<i32>} : memref<96x128xbf16, #tpu.memory_space<vmem>>, vector<96x128xbf16>,
    return
  }
  func.func @transform_0(%arg0: i32, %arg1: memref<2xi32, #tpu.memory_space<smem>>) -> (i32, i32) {
    %c0_i32 = arith.constant 0 : i32
    %c0_i32_0 = arith.constant 0 : i32
    return %arg0, %c0_i32 : i32, i32
  }
  func.func @transform_1(%arg0: i32, %arg1: memref<2xi32, #tpu.memory_space<smem>>) -> (i32, i32) {
    %c0_i32 = arith.constant 0 : i32
    %c0_i32_0 = arith.constant 0 : i32
    return %arg0, %c0_i32 : i32, i32
  }
  func.func @transform_2(%arg0: i32, %arg1: memref<2xi32, #tpu.memory_space<smem>>) -> (i32, i32, i32) {
    %c0_i32 = arith.constant 0 : i32
    %c0_i32_0 = arith.constant 0 : i32
    %c0_i32_1 = arith.constant 0 : i32
    %c0_i32_2 = arith.constant 0 : i32
    return %c0_i32, %c0_i32_0, %c0_i32_1 : i32, i32, i32
  }
  func.func @transform_3(%arg0: i32, %arg1: memref<2xi32, #tpu.memory_space<smem>>) -> (i32, i32, i32) {
    %c0_i32 = arith.constant 0 : i32
    %c0_i32_0 = arith.constant 0 : i32
    %c0_i32_1 = arith.constant 0 : i32
    %c0_i32_2 = arith.constant 0 : i32
    return %c0_i32, %c0_i32_0, %c0_i32_1 : i32, i32, i32
  }
  func.func @transform_4(%arg0: i32, %arg1: memref<2xi32, #tpu.memory_space<smem>>) -> (i32, i32, i32) {
    %c0_i32 = arith.constant 0 : i32
    %c0_i32_0 = arith.constant 0 : i32
    %c0_i32_1 = arith.constant 0 : i32
    %c0_i32_2 = arith.constant 0 : i32
    return %c0_i32, %c0_i32_0, %c0_i32_1 : i32, i32, i32
  }
  func.func @transform_5(%arg0: i32, %arg1: memref<2xi32, #tpu.memory_space<smem>>) -> (i32, i32, i32) {
    %c0_i32 = arith.constant 0 : i32
    %c0_i32_0 = arith.constant 0 : i32
    %c0_i32_1 = arith.constant 0 : i32
    %c0_i32_2 = arith.constant 0 : i32
    return %c0_i32, %c0_i32_0, %c0_i32_1 : i32, i32, i32
  }
  func.func @transform_6(%arg0: i32, %arg1: memref<2xi32, #tpu.memory_space<smem>>) -> (i32, i32, i32) {
    %c0_i32 = arith.constant 0 : i32
    %c0_i32_0 = arith.constant 0 : i32
    %c0_i32_1 = arith.constant 0 : i32
    %c0_i32_2 = arith.constant 0 : i32
    return %c0_i32, %c0_i32_0, %c0_i32_1 : i32, i32, i32
  }
  func.func @transform_7(%arg0: i32, %arg1: memref<2xi32, #tpu.memory_space<smem>>) -> (i32, i32) {
    %c0_i32 = arith.constant 0 : i32
    %c0_i32_0 = arith.constant 0 : i32
    return %arg0, %c0_i32 : i32, i32
  }
}

</mosaic_0001>

<llo_original>
// kernel: tpu_custom_call.1
$region0: #{tpu_custom_call.1}
  #allocation0 [shape = 'u32[]', space=smem, size = 0x4, offset = 0x4, fixed_abs, tag = 'smem constant byte address 0x4 - core index']
  #allocation1 [shape = 'u32[144,128]{1,0:T(1,128)}', space=vmem, size = 0x12000, scoped, tag = 'internal scratch']
  #allocation2 [shape = 's32[1]{0}', space=sflag, size = 0x4, scoped, tag = 'scoped memory for tpu_custom_call.1']
  #allocation3 [shape = 'u8[512]{0}', space=smem, size = 0x200, scoped, tag = 'prefetched SMEM operand 0']
  %s0 = inlined_call_operand.hbm [shape: s32[2], index: 0, kind: input, shape index: {}]
  %s1 = inlined_call_operand.hbm [shape: bf16[192,128], index: 1, kind: input, shape index: {}]
  %s2 = inlined_call_operand.hbm [shape: bf16[192,256], index: 2, kind: input, shape index: {}]
  %s3 = inlined_call_operand.hbm [shape: bf16[2,128,128], index: 3, kind: input, shape index: {}]
  %s4 = inlined_call_operand.hbm [shape: bf16[2,256,128], index: 4, kind: input, shape index: {}]
  %s5 = inlined_call_operand.vmem [shape: f32[2,1,128], index: 5, kind: input, shape index: {}]
  %s6 = inlined_call_operand.vmem [shape: f32[2,1,128], index: 6, kind: input, shape index: {}]
  %s7 = inlined_call_operand.vmem [shape: f32[2,1,128], index: 7, kind: input, shape index: {}]
  %s8 = inlined_call_operand.hbm [shape: bf16[192,128], index: 8, kind: output, shape index: {}]
  %s9 = sld [smem:[#allocation0]]
  $region77: #{tpu_custom_call.1} parent=0
    _
  %s11 = ssub.s32 1, %s9
  %s12 = scalar_select 0, %s11, %s9
  %14 = dma.hbm_to_smem %s0, 16, [#allocation3], [#allocation2]
  %15 = dma.done [#allocation2], 16
  %16 = sfence
  $region1: #{tpu_custom_call.1} parent=0
    #allocation4 [shape = 'u8[49152]{0}', space=vmem, size = 0xc000, scoped, tag = 'input window, operand 1']
    #allocation5 [shape = 's32[2]{0}', space=sflag, size = 0x8, scoped, tag = 'scoped memory for tpu_custom_call.1']
    #allocation6 [shape = 's32[2]{0}', space=sflag, size = 0x8, scoped, tag = 'scoped memory for tpu_custom_call.1']
    #allocation7 [shape = 'u8[98304]{0}', space=vmem, size = 0x18000, scoped, tag = 'input window, operand 2']
    #allocation8 [shape = 's32[2]{0}', space=sflag, size = 0x8, scoped, tag = 'scoped memory for tpu_custom_call.1']
    #allocation9 [shape = 'u8[65536]{0}', space=vmem, size = 0x10000, scoped, tag = 'input window, operand 3, single buffered']
    #allocation10 [shape = 'u8[131072]{0}', space=vmem, size = 0x20000, scoped, tag = 'input window, operand 4, single buffered']
    #allocation11 [shape = 's32[1]{0}', space=sflag, size = 0x4, scoped, tag = 'scoped memory for tpu_custom_call.1']
    #allocation12 [shape = 'u8[49152]{0}', space=vmem, size = 0xc000, scoped, tag = 'output window, operand 0']
    %17 = vsyncpa [#allocation5], 0
    %s18 = scalar_lea.sflag [#allocation5], 1
    %19 = vsyncpa %s18, 0
    %20 = vsyncpa [#allocation8], 0
    %s21 = scalar_lea.sflag [#allocation8], 1
    %22 = vsyncpa %s21, 0
    %23 = vsyncpa [#allocation11], 0
    %24 = vsyncpa [#allocation6], 0
    %s25 = scalar_lea.sflag [#allocation6], 1
    %26 = vsyncpa %s25, 0
    loop: start=0, step=1, limit=4
    $region2: #{tpu_custom_call.1} parent=1 // loop_pre_header
      _
    $region3: #{tpu_custom_call.1} parent=1 // loop_header
      %s28 = sphi 0, %s32
      %p29 = scmp.ge.s32.totalorder %s28, 4
      %s38 = sphi 0, %s40
      %s41 = sphi 0, %s38
      %s42 = sphi 0, %s41
      %s58 = sphi 0, %s42
      %s64 = sphi 0, %s66
      %s67 = sphi 0, %s64
      %s68 = sphi 0, %s67
      %s84 = sphi 0, %s68
      %s88 = sphi 0, %s88
      %s90 = sphi 0, %s88
      %s91 = sphi 0, %s90
      %s105 = sphi 0, %s91
      %s109 = sphi 0, %s109
      %s111 = sphi 0, %s109
      %s112 = sphi 0, %s111
      %s126 = sphi 0, %s112
      %s130 = sphi 0, %s130
      %s132 = sphi 0, %s130
      %s133 = sphi 0, %s132
      %s147 = sphi 0, %s133
      %s151 = sphi 0, %s151
      %s153 = sphi 0, %s151
      %s154 = sphi 0, %s153
      %s168 = sphi 0, %s154
      %s172 = sphi 0, %s172
      %s174 = sphi 0, %s172
      %s175 = sphi 0, %s174
      %s189 = sphi 0, %s175
      %s195 = sphi 0, %s197
      %s198 = sphi 0, %s195
      %s199 = sphi 0, %s198
      %s215 = sphi 0, %s199
    $region4: #{tpu_custom_call.1} parent=1 // loop_header_branch
      %31 = sbr.rel (%p29) target = $region8
    $region5: #{tpu_custom_call.1} parent=1 // loop_body
      %s33 = ssub.s32 %s28, 1
      %s34 = ssub.s32 %s28, 2
      %s35 = sadd.s32 %s28, 1
      %s36 = ssub.s32 %s28, %s35
      %p37 = scmp.eq.s32.totalorder %s36, 0
      %s39 = sadd.s32 %s38, 1
      %s40 = scalar_select %p37, %s38, %s39
      %p43 = pneg %p37
      %p44 = scmp.eq.s32.totalorder %s28, 1
      %p45 = por %p43, %p44
      %p46 = scmp.ne.s32.totalorder %s38, %s41
      %p47 = scmp.eq.s32.totalorder %s28, 0
      %p48 = por %p46, %p47
      %p49 = scmp.ne.s32.totalorder %s38, %s41
      %p50 = scmp.eq.s32.totalorder %s33, 1
      %p51 = por %p49, %p50
      %p52 = scmp.ne.s32.totalorder %s41, %s42
      %p53 = scmp.eq.s32.totalorder %s33, 0
      %p54 = por %p52, %p53
      %p55 = scmp.ne.s32.totalorder %s41, %s42
      %p56 = scmp.eq.s32.totalorder %s34, 1
      %p57 = por %p55, %p56
      %p59 = scmp.ne.s32.totalorder %s42, %s58
      %p60 = scmp.eq.s32.totalorder %s34, 0
      %p61 = por %p59, %p60
      %s62 = ssub.s32 %s28, %s35
      %p63 = scmp.eq.s32.totalorder %s62, 0
      %s65 = sadd.s32 %s64, 1
      %s66 = scalar_select %p63, %s64, %s65
      %p69 = pneg %p63
      %p70 = scmp.eq.s32.totalorder %s28, 1
      %p71 = por %p69, %p70
      %p72 = scmp.ne.s32.totalorder %s64, %s67
      %p73 = scmp.eq.s32.totalorder %s28, 0
      %p74 = por %p72, %p73
      %p75 = scmp.ne.s32.totalorder %s64, %s67
      %p76 = scmp.eq.s32.totalorder %s33, 1
      %p77 = por %p75, %p76
      %p78 = scmp.ne.s32.totalorder %s67, %s68
      %p79 = scmp.eq.s32.totalorder %s33, 0
      %p80 = por %p78, %p79
      %p81 = scmp.ne.s32.totalorder %s67, %s68
      %p82 = scmp.eq.s32.totalorder %s34, 1
      %p83 = por %p81, %p82
      %p85 = scmp.ne.s32.totalorder %s68, %s84
      %p86 = scmp.eq.s32.totalorder %s34, 0
      %p87 = por %p85, %p86
      %s89 = sadd.s32 %s88, 1
      %p92 = scmp.eq.s32.totalorder %s28, 1
      %p93 = scmp.ne.s32.totalorder %s88, %s90
      %p94 = scmp.eq.s32.totalorder %s28, 0
      %p95 = por %p93, %p94
      %p96 = scmp.ne.s32.totalorder %s88, %s90
      %p97 = scmp.eq.s32.totalorder %s33, 1
      %p98 = por %p96, %p97
      %p99 = scmp.ne.s32.totalorder %s90, %s91
      %p100 = scmp.eq.s32.totalorder %s33, 0
      %p101 = por %p99, %p100
      %p102 = scmp.ne.s32.totalorder %s90, %s91
      %p103 = scmp.eq.s32.totalorder %s34, 1
      %p104 = por %p102, %p103
      %p106 = scmp.ne.s32.totalorder %s91, %s105
      %p107 = scmp.eq.s32.totalorder %s34, 0
      %p108 = por %p106, %p107
      %s110 = sadd.s32 %s109, 1
      %p113 = scmp.eq.s32.totalorder %s28, 1
      %p114 = scmp.ne.s32.totalorder %s109, %s111
      %p115 = scmp.eq.s32.totalorder %s28, 0
      %p116 = por %p114, %p115
      %p117 = scmp.ne.s32.totalorder %s109, %s111
      %p118 = scmp.eq.s32.totalorder %s33, 1
      %p119 = por %p117, %p118
      %p120 = scmp.ne.s32.totalorder %s111, %s112
      %p121 = scmp.eq.s32.totalorder %s33, 0
      %p122 = por %p120, %p121
      %p123 = scmp.ne.s32.totalorder %s111, %s112
      %p124 = scmp.eq.s32.totalorder %s34, 1
      %p125 = por %p123, %p124
      %p127 = scmp.ne.s32.totalorder %s112, %s126
      %p128 = scmp.eq.s32.totalorder %s34, 0
      %p129 = por %p127, %p128
      %s131 = sadd.s32 %s130, 1
      %p134 = scmp.eq.s32.totalorder %s28, 1
      %p135 = scmp.ne.s32.totalorder %s130, %s132
      %p136 = scmp.eq.s32.totalorder %s28, 0
      %p137 = por %p135, %p136
      %p138 = scmp.ne.s32.totalorder %s130, %s132
      %p139 = scmp.eq.s32.totalorder %s33, 1
      %p140 = por %p138, %p139
      %p141 = scmp.ne.s32.totalorder %s132, %s133
      %p142 = scmp.eq.s32.totalorder %s33, 0
      %p143 = por %p141, %p142
      %p144 = scmp.ne.s32.totalorder %s132, %s133
      %p145 = scmp.eq.s32.totalorder %s34, 1
      %p146 = por %p144, %p145
      %p148 = scmp.ne.s32.totalorder %s133, %s147
      %p149 = scmp.eq.s32.totalorder %s34, 0
      %p150 = por %p148, %p149
      %s152 = sadd.s32 %s151, 1
      %p155 = scmp.eq.s32.totalorder %s28, 1
      %p156 = scmp.ne.s32.totalorder %s151, %s153
      %p157 = scmp.eq.s32.totalorder %s28, 0
      %p158 = por %p156, %p157
      %p159 = scmp.ne.s32.totalorder %s151, %s153
      %p160 = scmp.eq.s32.totalorder %s33, 1
      %p161 = por %p159, %p160
      %p162 = scmp.ne.s32.totalorder %s153, %s154
      %p163 = scmp.eq.s32.totalorder %s33, 0
      %p164 = por %p162, %p163
      %p165 = scmp.ne.s32.totalorder %s153, %s154
      %p166 = scmp.eq.s32.totalorder %s34, 1
      %p167 = por %p165, %p166
      %p169 = scmp.ne.s32.totalorder %s154, %s168
      %p170 = scmp.eq.s32.totalorder %s34, 0
      %p171 = por %p169, %p170
      %s173 = sadd.s32 %s172, 1
      %p176 = scmp.eq.s32.totalorder %s28, 1
      %p177 = scmp.ne.s32.totalorder %s172, %s174
      %p178 = scmp.eq.s32.totalorder %s28, 0
      %p179 = por %p177, %p178
      %p180 = scmp.ne.s32.totalorder %s172, %s174
      %p181 = scmp.eq.s32.totalorder %s33, 1
      %p182 = por %p180, %p181
      %p183 = scmp.ne.s32.totalorder %s174, %s175
      %p184 = scmp.eq.s32.totalorder %s33, 0
      %p185 = por %p183, %p184
      %p186 = scmp.ne.s32.totalorder %s174, %s175
      %p187 = scmp.eq.s32.totalorder %s34, 1
      %p188 = por %p186, %p187
      %p190 = scmp.ne.s32.totalorder %s175, %s189
      %p191 = scmp.eq.s32.totalorder %s34, 0
      %p192 = por %p190, %p191
      %s193 = ssub.s32 %s28, %s35
      %p194 = scmp.eq.s32.totalorder %s193, 0
      %s196 = sadd.s32 %s195, 1
      %s197 = scalar_select %p194, %s195, %s196
      %p200 = pneg %p194
      %p201 = scmp.eq.s32.totalorder %s28, 1
      %p202 = por %p200, %p201
      %p203 = scmp.ne.s32.totalorder %s195, %s198
      %p204 = scmp.eq.s32.totalorder %s28, 0
      %p205 = por %p203, %p204
      %p206 = scmp.ne.s32.totalorder %s195, %s198
      %p207 = scmp.eq.s32.totalorder %s33, 1
      %p208 = por %p206, %p207
      %p209 = scmp.ne.s32.totalorder %s198, %s199
      %p210 = scmp.eq.s32.totalorder %s33, 0
      %p211 = por %p209, %p210
      %p212 = scmp.ne.s32.totalorder %s198, %s199
      %p213 = scmp.eq.s32.totalorder %s34, 1
      %p214 = por %p212, %p213
      %p216 = scmp.ne.s32.totalorder %s199, %s215
      %p217 = scmp.eq.s32.totalorder %s34, 0
      %p218 = por %p216, %p217
      %p219 = scmp.le.s32.totalorder 1, %s28
      %p220 = scmp.lt.s32.totalorder %s28, 3
      %p221 = pnand %p219, %p220
      %p222 = pneg %p221
      // Predicated region
      $region9: #{tpu_custom_call.1} parent=5 // pred_check
        _
      $region10: #{tpu_custom_call.1} parent=5 // pred_check_branch
        %224 = sbr.rel (%p221) target = $region12
      $region11: #{tpu_custom_call.1} parent=5 // pred_region
        %s225 = ssub.s32 %s28, 1
        // Predicated region
        $region13: #{tpu_custom_call.1} parent=11 // pred_check
          %p226 = pneg %p101
        $region14: #{tpu_custom_call.1} parent=11 // pred_check_branch
          %228 = sbr.rel (%p226) target = $region16
        $region15: #{tpu_custom_call.1} parent=11 // pred_region
          %s230 = ssub.s32 2048, 2048
          %231 = vsyncadd [#allocation8], %s230
          %s232 = sshll.u32 [#allocation9], 4
          %s233 = int_to_ptr.vmem [resolvable:$true] %s232
          %238 = dma.hbm_to_vmem [thread:$0]  %s3, 2048, %s233, [#allocation8], 64, 64, 4
        $region16: #{tpu_custom_call.1} parent=11 // pred_fallthru
          _
        // Predicated region
        $region17: #{tpu_custom_call.1} parent=11 // pred_check
          %p239 = pneg %p122
        $region18: #{tpu_custom_call.1} parent=11 // pred_check_branch
          %241 = sbr.rel (%p239) target = $region20
        $region19: #{tpu_custom_call.1} parent=11 // pred_region
          %s243 = ssub.s32 4096, 4096
          %244 = vsyncadd [#allocation11], %s243
          %s245 = sshll.u32 [#allocation10], 4
          %s246 = int_to_ptr.vmem [resolvable:$true] %s245
          %251 = dma.hbm_to_vmem [thread:$0]  %s4, 4096, %s246, [#allocation11], 64, 64, 4
        $region20: #{tpu_custom_call.1} parent=11 // pred_fallthru
          _
        // Predicated region
        $region21: #{tpu_custom_call.1} parent=11 // pred_check
          %p252 = pneg %p143
        $region22: #{tpu_custom_call.1} parent=11 // pred_check_branch
          %254 = sbr.rel (%p252) target = $region24
        $region23: #{tpu_custom_call.1} parent=11 // pred_region
          _
        $region24: #{tpu_custom_call.1} parent=11 // pred_fallthru
          _
        // Predicated region
        $region25: #{tpu_custom_call.1} parent=11 // pred_check
          %p255 = pneg %p164
        $region26: #{tpu_custom_call.1} parent=11 // pred_check_branch
          %257 = sbr.rel (%p255) target = $region28
        $region27: #{tpu_custom_call.1} parent=11 // pred_region
          _
        $region28: #{tpu_custom_call.1} parent=11 // pred_fallthru
          _
        // Predicated region
        $region29: #{tpu_custom_call.1} parent=11 // pred_check
          %p258 = pneg %p185
        $region30: #{tpu_custom_call.1} parent=11 // pred_check_branch
          %260 = sbr.rel (%p258) target = $region32
        $region31: #{tpu_custom_call.1} parent=11 // pred_region
          _
        $region32: #{tpu_custom_call.1} parent=11 // pred_fallthru
          _
      $region12: #{tpu_custom_call.1} parent=5 // pred_fallthru
        _
      %p261 = scmp.lt.s32.totalorder %s28, 2
      // Predicated region
      $region33: #{tpu_custom_call.1} parent=5 // pred_check
        %p262 = pneg %p261
      $region34: #{tpu_custom_call.1} parent=5 // pred_check_branch
        %264 = sbr.rel (%p262) target = $region36
      $region35: #{tpu_custom_call.1} parent=5 // pred_region
        // Predicated region
        $region37: #{tpu_custom_call.1} parent=35 // pred_check
          %p265 = pneg %p48
        $region38: #{tpu_custom_call.1} parent=35 // pred_check_branch
          %267 = sbr.rel (%p265) target = $region40
        $region39: #{tpu_custom_call.1} parent=35 // pred_region
          %s268 = sand.u32 %s38, 1
          %s269 = scalar_lea.sflag [#allocation5], %s268
          %s270 = sand.u32 %s38, 1
          %s271 = smul.addr %s270, 48
          %s272 = scalar_lea.vmem [#allocation4], %s271
          %s273 = smul.u32 12, %s28
          %s275 = ssub.s32 768, 768
          %276 = vsyncadd %s269, %s275
          %s277 = smul.addr %s273, 64
          %s278 = scalar_lea.hbm %s1, %s277
          %s279 = sshll.u32 %s272, 4
          %s280 = int_to_ptr.vmem [resolvable:$true] %s279
          %285 = dma.hbm_to_vmem [thread:$0]  %s278, 768, %s280, %s269, 64, 64, 4
        $region40: #{tpu_custom_call.1} parent=35 // pred_fallthru
          _
        // Predicated region
        $region41: #{tpu_custom_call.1} parent=35 // pred_check
          %p286 = pneg %p74
        $region42: #{tpu_custom_call.1} parent=35 // pred_check_branch
          %288 = sbr.rel (%p286) target = $region44
        $region43: #{tpu_custom_call.1} parent=35 // pred_region
          %s289 = sand.u32 %s28, 1
          %s290 = scalar_lea.sflag [#allocation8], %s289
          %s291 = sand.u32 %s64, 1
          %s292 = smul.addr %s291, 96
          %s293 = scalar_lea.vmem [#allocation7], %s292
          %s294 = smul.u32 12, %s28
          %s296 = ssub.s32 1536, 1536
          %297 = vsyncadd %s290, %s296
          %s298 = smul.addr %s294, 2
          %s299 = smul.addr %s298, 64
          %s300 = scalar_lea.hbm %s2, %s299
          %s301 = sshll.u32 %s293, 4
          %s302 = int_to_ptr.vmem [resolvable:$true] %s301
          %307 = dma.hbm_to_vmem [thread:$0]  %s300, 1536, %s302, %s290, 128, 128, 8
        $region44: #{tpu_custom_call.1} parent=35 // pred_fallthru
          _
      $region36: #{tpu_custom_call.1} parent=5 // pred_fallthru
        _
      %p308 = scmp.le.s32.totalorder 1, %s28
      %p309 = scmp.lt.s32.totalorder %s28, 3
      %p310 = pnand %p308, %p309
      %p311 = pneg %p310
      // Predicated region
      $region45: #{tpu_custom_call.1} parent=5 // pred_check
        _
      $region46: #{tpu_custom_call.1} parent=5 // pred_check_branch
        %313 = sbr.rel (%p310) target = $region48
      $region47: #{tpu_custom_call.1} parent=5 // pred_region
        %s314 = ssub.s32 %s28, 1
        %s315 = sand.u32 %s41, 1
        %s316 = scalar_lea.sflag [#allocation5], %s315
        %s317 = sand.u32 %s41, 1
        %s318 = smul.addr %s317, 48
        %s319 = scalar_lea.vmem [#allocation4], %s318
        // Predicated region
        $region49: #{tpu_custom_call.1} parent=47 // pred_check
          %p320 = pneg %p54
        $region50: #{tpu_custom_call.1} parent=47 // pred_check_branch
          %322 = sbr.rel (%p320) target = $region52
        $region51: #{tpu_custom_call.1} parent=47 // pred_region
          %323 = dma.done %s316, 768
        $region52: #{tpu_custom_call.1} parent=47 // pred_fallthru
          _
        %s324 = sand.u32 %s33, 1
        %s325 = scalar_lea.sflag [#allocation8], %s324
        %s326 = sand.u32 %s67, 1
        %s327 = smul.addr %s326, 96
        %s328 = scalar_lea.vmem [#allocation7], %s327
        // Predicated region
        $region53: #{tpu_custom_call.1} parent=47 // pred_check
          %p329 = pneg %p80
        $region54: #{tpu_custom_call.1} parent=47 // pred_check_branch
          %331 = sbr.rel (%p329) target = $region56
        $region55: #{tpu_custom_call.1} parent=47 // pred_region
          %332 = dma.done %s325, 1536
        $region56: #{tpu_custom_call.1} parent=47 // pred_fallthru
          _
        // Predicated region
        $region57: #{tpu_custom_call.1} parent=47 // pred_check
          %p333 = pneg %p101
        $region58: #{tpu_custom_call.1} parent=47 // pred_check_branch
          %335 = sbr.rel (%p333) target = $region60
        $region59: #{tpu_custom_call.1} parent=47 // pred_region
          %336 = dma.done [#allocation8], 2048
        $region60: #{tpu_custom_call.1} parent=47 // pred_fallthru
          _
        // Predicated region
        $region61: #{tpu_custom_call.1} parent=47 // pred_check
          %p337 = pneg %p122
        $region62: #{tpu_custom_call.1} parent=47 // pred_check_branch
          %339 = sbr.rel (%p337) target = $region64
        $region63: #{tpu_custom_call.1} parent=47 // pred_region
          %340 = dma.done [#allocation11], 4096
        $region64: #{tpu_custom_call.1} parent=47 // pred_fallthru
          _
        %s341 = sand.u32 %s41, 1
        %s342 = scalar_lea.sflag [#allocation5], %s341
        %s343 = sand.u32 %s41, 1
        %s344 = smul.addr %s343, 48
        %s345 = scalar_lea.vmem [#allocation4], %s344
        %p346 = pneg %p54
        %p347 = pneg %p51
        %s348 = sand.u32 %s33, 1
        %s349 = scalar_lea.sflag [#allocation8], %s348
        %s350 = sand.u32 %s67, 1
        %s351 = smul.addr %s350, 96
        %s352 = scalar_lea.vmem [#allocation7], %s351
        %p353 = pneg %p80
        %p354 = pneg %p77
        %p355 = pneg %p101
        %p356 = pneg %p98
        %p357 = pneg %p122
        %p358 = pneg %p119
        %p359 = pneg %p143
        %p360 = pneg %p140
        %p361 = pneg %p164
        %p362 = pneg %p161
        %p363 = pneg %p185
        %p364 = pneg %p182
        %p365 = pneg %p211
        %p366 = pneg %p208
        %s367 = sand.u32 %s198, 1
        %s368 = scalar_lea.sflag [#allocation6], %s367
        %s369 = sand.u32 %s198, 1
        %s370 = smul.addr %s369, 48
        %s371 = scalar_lea.vmem [#allocation12], %s370
        %s372 = smul.u32 12, %s33
        %s373 = smul.u32 12, %s33
        %s374 = smul.u32 12, %s33
        %s376 = sld [smem:[#allocation3 + %s33]]
        %v377 = vld [vmem:[%s319] sm:$0xf]
        %v378 = vld [vmem:[%s319 + $0x4] sm:$0xf]
        %v379 = vld [vmem:[%s319 + $0x8] sm:$0xf]
        %v380 = vld [vmem:[%s319 + $0xc] sm:$0xf]
        %v381 = vld [vmem:[%s319 + $0x10] sm:$0xf]
        %v382 = vld [vmem:[%s319 + $0x14] sm:$0xf]
        %v383 = vld [vmem:[%s319 + $0x18] sm:$0xf]
        %v384 = vld [vmem:[%s319 + $0x1c] sm:$0xf]
        %v385 = vld [vmem:[%s319 + $0x20] sm:$0xf]
        %v386 = vld [vmem:[%s319 + $0x24] sm:$0xf]
        %v387 = vld [vmem:[%s319 + $0x28] sm:$0xf]
        %v388 = vld [vmem:[%s319 + $0x2c] sm:$0xf]
        %s389 = smul.u32 %s376, 16
        %s390 = smul.addr %s389, 4
        %s391 = scalar_lea.vmem [#allocation9], %s390
        %v392 = vld [vmem:[%s391] sm:$0xf]
        %v393 = vld [vmem:[%s391 + $0x4] sm:$0xf]
        %v394 = vld [vmem:[%s391 + $0x8] sm:$0xf]
        %v395 = vld [vmem:[%s391 + $0xc] sm:$0xf]
        %v396 = vld [vmem:[%s391 + $0x10] sm:$0xf]
        %v397 = vld [vmem:[%s391 + $0x14] sm:$0xf]
        %v398 = vld [vmem:[%s391 + $0x18] sm:$0xf]
        %v399 = vld [vmem:[%s391 + $0x1c] sm:$0xf]
        %v400 = vld [vmem:[%s391 + $0x20] sm:$0xf]
        %v401 = vld [vmem:[%s391 + $0x24] sm:$0xf]
        %v402 = vld [vmem:[%s391 + $0x28] sm:$0xf]
        %v403 = vld [vmem:[%s391 + $0x2c] sm:$0xf]
        %v404 = vld [vmem:[%s391 + $0x30] sm:$0xf]
        %v405 = vld [vmem:[%s391 + $0x34] sm:$0xf]
        %v406 = vld [vmem:[%s391 + $0x38] sm:$0xf]
        %v407 = vld [vmem:[%s391 + $0x3c] sm:$0xf]
        %v408 = vld [vmem:[%s328] sm:$0xff]
        %v409 = vld [vmem:[%s328 + $0x8] sm:$0xff]
        %v410 = vld [vmem:[%s328 + $0x10] sm:$0xff]
        %v411 = vld [vmem:[%s328 + $0x18] sm:$0xff]
        %v412 = vld [vmem:[%s328 + $0x20] sm:$0xff]
        %v413 = vld [vmem:[%s328 + $0x28] sm:$0xff]
        %v414 = vld [vmem:[%s328 + $0x30] sm:$0xff]
        %v415 = vld [vmem:[%s328 + $0x38] sm:$0xff]
        %v416 = vld [vmem:[%s328 + $0x40] sm:$0xff]
        %v417 = vld [vmem:[%s328 + $0x48] sm:$0xff]
        %v418 = vld [vmem:[%s328 + $0x50] sm:$0xff]
        %v419 = vld [vmem:[%s328 + $0x58] sm:$0xff]
        %s420 = smul.u32 %s376, 32
        %s421 = smul.addr %s420, 4
        %s422 = scalar_lea.vmem [#allocation10], %s421
        %v423 = vld [vmem:[%s422] sm:$0xf]
        %v424 = vld [vmem:[%s422 + $0x4] sm:$0xf]
        %v425 = vld [vmem:[%s422 + $0x8] sm:$0xf]
        %v426 = vld [vmem:[%s422 + $0xc] sm:$0xf]
        %v427 = vld [vmem:[%s422 + $0x10] sm:$0xf]
        %v428 = vld [vmem:[%s422 + $0x14] sm:$0xf]
        %v429 = vld [vmem:[%s422 + $0x18] sm:$0xf]
        %v430 = vld [vmem:[%s422 + $0x1c] sm:$0xf]
        %v431 = vld [vmem:[%s422 + $0x20] sm:$0xf]
        %v432 = vld [vmem:[%s422 + $0x24] sm:$0xf]
        %v433 = vld [vmem:[%s422 + $0x28] sm:$0xf]
        %v434 = vld [vmem:[%s422 + $0x2c] sm:$0xf]
        %v435 = vld [vmem:[%s422 + $0x30] sm:$0xf]
        %v436 = vld [vmem:[%s422 + $0x34] sm:$0xf]
        %v437 = vld [vmem:[%s422 + $0x38] sm:$0xf]
        %v438 = vld [vmem:[%s422 + $0x3c] sm:$0xf]
        %v439 = vld [vmem:[%s422 + $0x40] sm:$0xf]
        %v440 = vld [vmem:[%s422 + $0x44] sm:$0xf]
        %v441 = vld [vmem:[%s422 + $0x48] sm:$0xf]
        %v442 = vld [vmem:[%s422 + $0x4c] sm:$0xf]
        %v443 = vld [vmem:[%s422 + $0x50] sm:$0xf]
        %v444 = vld [vmem:[%s422 + $0x54] sm:$0xf]
        %v445 = vld [vmem:[%s422 + $0x58] sm:$0xf]
        %v446 = vld [vmem:[%s422 + $0x5c] sm:$0xf]
        %v447 = vld [vmem:[%s422 + $0x60] sm:$0xf]
        %v448 = vld [vmem:[%s422 + $0x64] sm:$0xf]
        %v449 = vld [vmem:[%s422 + $0x68] sm:$0xf]
        %v450 = vld [vmem:[%s422 + $0x6c] sm:$0xf]
        %v451 = vld [vmem:[%s422 + $0x70] sm:$0xf]
        %v452 = vld [vmem:[%s422 + $0x74] sm:$0xf]
        %v453 = vld [vmem:[%s422 + $0x78] sm:$0xf]
        %v454 = vld [vmem:[%s422 + $0x7c] sm:$0xf]
        %v467 = vunpack.c.l.b16 %v408
        %v468 = vunpack.c.h.b16 %v408
        %v469 = vunpack.c.l.b16 %v409
        %v470 = vunpack.c.h.b16 %v409
        %v471 = vunpack.c.l.b16 %v410
        %v472 = vunpack.c.h.b16 %v410
        %v473 = vunpack.c.l.b16 %v411
        %v474 = vunpack.c.h.b16 %v411
        %v475 = vunpack.c.l.b16 %v412
        %v476 = vunpack.c.h.b16 %v412
        %v477 = vunpack.c.l.b16 %v413
        %v478 = vunpack.c.h.b16 %v413
        %v479 = vunpack.c.l.b16 %v414
        %v480 = vunpack.c.h.b16 %v414
        %v481 = vunpack.c.l.b16 %v415
        %v482 = vunpack.c.h.b16 %v415
        %v483 = vunpack.c.l.b16 %v416
        %v484 = vunpack.c.h.b16 %v416
        %v485 = vunpack.c.l.b16 %v417
        %v486 = vunpack.c.h.b16 %v417
        %v487 = vunpack.c.l.b16 %v418
        %v488 = vunpack.c.h.b16 %v418
        %v489 = vunpack.c.l.b16 %v419
        %v490 = vunpack.c.h.b16 %v419
        %v491 = vpack.c.b16 %v469, %v467
        %v492 = vpack.c.b16 %v470, %v468
        %v493 = vpack.c.b16 %v473, %v471
        %v494 = vpack.c.b16 %v474, %v472
        %v495 = vpack.c.b16 %v477, %v475
        %v496 = vpack.c.b16 %v478, %v476
        %v497 = vpack.c.b16 %v481, %v479
        %v498 = vpack.c.b16 %v482, %v480
        %v499 = vpack.c.b16 %v485, %v483
        %v500 = vpack.c.b16 %v486, %v484
        %v501 = vpack.c.b16 %v489, %v487
        %v502 = vpack.c.b16 %v490, %v488
        %v547 = vunpack.c.l.b16 %v423
        %v548 = vunpack.c.l.b16 %v424
        %v549 = vunpack.c.l.b16 %v425
        %v550 = vunpack.c.l.b16 %v426
        %v551 = vunpack.c.l.b16 %v427
        %v552 = vunpack.c.l.b16 %v428
        %v553 = vunpack.c.l.b16 %v429
        %v554 = vunpack.c.l.b16 %v430
        %v555 = vunpack.c.l.b16 %v431
        %v556 = vunpack.c.l.b16 %v432
        %v557 = vunpack.c.l.b16 %v433
        %v558 = vunpack.c.l.b16 %v434
        %v559 = vunpack.c.l.b16 %v435
        %v560 = vunpack.c.l.b16 %v436
        %v561 = vunpack.c.l.b16 %v437
        %v562 = vunpack.c.l.b16 %v438
        %v563 = vunpack.c.l.b16 %v439
        %v564 = vunpack.c.l.b16 %v440
        %v565 = vunpack.c.l.b16 %v441
        %v566 = vunpack.c.l.b16 %v442
        %v567 = vunpack.c.l.b16 %v443
        %v568 = vunpack.c.l.b16 %v444
        %v569 = vunpack.c.l.b16 %v445
        %v570 = vunpack.c.l.b16 %v446
        %v571 = vunpack.c.l.b16 %v447
        %v572 = vunpack.c.l.b16 %v448
        %v573 = vunpack.c.l.b16 %v449
        %v574 = vunpack.c.l.b16 %v450
        %v575 = vunpack.c.l.b16 %v451
        %v576 = vunpack.c.l.b16 %v452
        %v577 = vunpack.c.l.b16 %v453
        %v578 = vunpack.c.l.b16 %v454
        %v579 = vpack.c.b16 %v548, %v547
        %v580 = vpack.c.b16 %v550, %v549
        %v581 = vpack.c.b16 %v552, %v551
        %v582 = vpack.c.b16 %v554, %v553
        %v583 = vpack.c.b16 %v556, %v555
        %v584 = vpack.c.b16 %v558, %v557
        %v585 = vpack.c.b16 %v560, %v559
        %v586 = vpack.c.b16 %v562, %v561
        %v587 = vpack.c.b16 %v564, %v563
        %v588 = vpack.c.b16 %v566, %v565
        %v589 = vpack.c.b16 %v568, %v567
        %v590 = vpack.c.b16 %v570, %v569
        %v591 = vpack.c.b16 %v572, %v571
        %v592 = vpack.c.b16 %v574, %v573
        %v593 = vpack.c.b16 %v576, %v575
        %v594 = vpack.c.b16 %v578, %v577
        %611 = vmatprep.subr.bf16.mxu0 0
        %612 = vmatpush1.bf16.msra.mxu0 %v586
        %613 = vmatprep.subr.bf16.mxu0 0
        %614 = vmatpush1.bf16.msra.mxu0 %v585
        %615 = vmatprep.subr.bf16.mxu0 0
        %616 = vmatpush1.bf16.msra.mxu0 %v584
        %617 = vmatprep.subr.bf16.mxu0 0
        %618 = vmatpush1.bf16.msra.mxu0 %v583
        %619 = vmatprep.subr.bf16.mxu0 0
        %620 = vmatpush1.bf16.msra.mxu0 %v582
        %621 = vmatprep.subr.bf16.mxu0 0
        %622 = vmatpush1.bf16.msra.mxu0 %v581
        %623 = vmatprep.subr.bf16.mxu0 0
        %624 = vmatpush1.bf16.msra.mxu0 %v580
        %625 = vmatprep.subr.bf16.mxu0 0
        %626 = vmatpush1.bf16.msra.mxu0 %v579
        %627 = vmatprep.subr.bf16.mxu0 0
        %628 = vmatpush2.bf16.msra.mxu0 %v594
        %629 = vmatprep.subr.bf16.mxu0 0
        %630 = vmatpush2.bf16.msra.mxu0 %v593
        %631 = vmatprep.subr.bf16.mxu0 0
        %632 = vmatpush2.bf16.msra.mxu0 %v592
        %633 = vmatprep.subr.bf16.mxu0 0
        %634 = vmatpush2.bf16.msra.mxu0 %v591
        %635 = vmatprep.subr.bf16.mxu0 0
        %636 = vmatpush2.bf16.msra.mxu0 %v590
        %637 = vmatprep.subr.bf16.mxu0 0
        %638 = vmatpush2.bf16.msra.mxu0 %v589
        %639 = vmatprep.subr.bf16.mxu0 0
        %640 = vmatpush2.bf16.msra.mxu0 %v588
        %641 = vmatprep.subr.bf16.mxu0 0
        %642 = vmatpush2.bf16.msra.mxu0 %v587
        %643 = vmatprep.mubr.bf16.mxu0 %v492
        %644 = vmatmul.mubr.bf16.gmra.mxu0 %v491
        %v645 = vpop.f32.mrf.mxu0
        %v646 = vadd.f32 0.0, %v645
        %v647 = vpop.f32.mrf.mxu0
        %v648 = vpop.f32.mrf.mxu0
        %v649 = vadd.f32 0.0, %v648
        %v650 = vpop.f32.mrf.mxu0
        %651 = vmatprep.mubr.bf16.mxu0 %v494
        %652 = vmatmul.mubr.bf16.gmra.mxu0 %v493
        %v653 = vpop.f32.mrf.mxu0
        %v654 = vadd.f32 0.0, %v653
        %v655 = vpop.f32.mrf.mxu0
        %v656 = vpop.f32.mrf.mxu0
        %v657 = vadd.f32 0.0, %v656
        %v658 = vpop.f32.mrf.mxu0
        %659 = vmatprep.mubr.bf16.mxu0 %v496
        %660 = vmatmul.mubr.bf16.gmra.mxu0 %v495
        %v661 = vpop.f32.mrf.mxu0
        %v662 = vadd.f32 0.0, %v661
        %v663 = vpop.f32.mrf.mxu0
        %v664 = vpop.f32.mrf.mxu0
        %v665 = vadd.f32 0.0, %v664
        %v666 = vpop.f32.mrf.mxu0
        %667 = vmatprep.mubr.bf16.mxu0 %v498
        %668 = vmatmul.mubr.bf16.gmra.mxu0 %v497
        %v669 = vpop.f32.mrf.mxu0
        %v670 = vadd.f32 0.0, %v669
        %v671 = vpop.f32.mrf.mxu0
        %v672 = vpop.f32.mrf.mxu0
        %v673 = vadd.f32 0.0, %v672
        %v674 = vpop.f32.mrf.mxu0
        %675 = vmatprep.mubr.bf16.mxu0 %v500
        %676 = vmatmul.mubr.bf16.gmra.mxu0 %v499
        %v677 = vpop.f32.mrf.mxu0
        %v678 = vadd.f32 0.0, %v677
        %v679 = vpop.f32.mrf.mxu0
        %v680 = vpop.f32.mrf.mxu0
        %v681 = vadd.f32 0.0, %v680
        %v682 = vpop.f32.mrf.mxu0
        %683 = vmatprep.mubr.bf16.mxu0 %v502
        %684 = vmatmul.mubr.bf16.gmra.mxu0 %v501
        %v685 = vpop.f32.mrf.mxu0
        %v686 = vadd.f32 0.0, %v685
        %v687 = vpop.f32.mrf.mxu0
        %v688 = vpop.f32.mrf.mxu0
        %v689 = vadd.f32 0.0, %v688
        %v690 = vpop.f32.mrf.mxu0
        %691 = vdwg.mxu0
        %v704 = vunpack.c.l.b16 %v377
        %v705 = vunpack.c.l.b16 %v378
        %v706 = vunpack.c.l.b16 %v379
        %v707 = vunpack.c.l.b16 %v380
        %v708 = vunpack.c.l.b16 %v381
        %v709 = vunpack.c.l.b16 %v382
        %v710 = vunpack.c.l.b16 %v383
        %v711 = vunpack.c.l.b16 %v384
        %v712 = vunpack.c.l.b16 %v385
        %v713 = vunpack.c.l.b16 %v386
        %v714 = vunpack.c.l.b16 %v387
        %v715 = vunpack.c.l.b16 %v388
        %v716 = vpack.c.b16 %v705, %v704
        %v717 = vpack.c.b16 %v707, %v706
        %v718 = vpack.c.b16 %v709, %v708
        %v719 = vpack.c.b16 %v711, %v710
        %v720 = vpack.c.b16 %v713, %v712
        %v721 = vpack.c.b16 %v715, %v714
        %v744 = vunpack.c.l.b16 %v392
        %v745 = vunpack.c.l.b16 %v393
        %v746 = vunpack.c.l.b16 %v394
        %v747 = vunpack.c.l.b16 %v395
        %v748 = vunpack.c.l.b16 %v396
        %v749 = vunpack.c.l.b16 %v397
        %v750 = vunpack.c.l.b16 %v398
        %v751 = vunpack.c.l.b16 %v399
        %v752 = vunpack.c.l.b16 %v400
        %v753 = vunpack.c.l.b16 %v401
        %v754 = vunpack.c.l.b16 %v402
        %v755 = vunpack.c.l.b16 %v403
        %v756 = vunpack.c.l.b16 %v404
        %v757 = vunpack.c.l.b16 %v405
        %v758 = vunpack.c.l.b16 %v406
        %v759 = vunpack.c.l.b16 %v407
        %v760 = vpack.c.b16 %v745, %v744
        %v761 = vpack.c.b16 %v747, %v746
        %v762 = vpack.c.b16 %v749, %v748
        %v763 = vpack.c.b16 %v751, %v750
        %v764 = vpack.c.b16 %v753, %v752
        %v765 = vpack.c.b16 %v755, %v754
        %v766 = vpack.c.b16 %v757, %v756
        %v767 = vpack.c.b16 %v759, %v758
        %776 = vmatprep.subr.bf16.mxu0 0
        %777 = vmatpush1.bf16.msra.mxu0 %v767
        %778 = vmatprep.subr.bf16.mxu0 0
        %779 = vmatpush1.bf16.msra.mxu0 %v766
        %780 = vmatprep.subr.bf16.mxu0 0
        %781 = vmatpush1.bf16.msra.mxu0 %v765
        %782 = vmatprep.subr.bf16.mxu0 0
        %783 = vmatpush1.bf16.msra.mxu0 %v764
        %784 = vmatprep.subr.bf16.mxu0 0
        %785 = vmatpush1.bf16.msra.mxu0 %v763
        %786 = vmatprep.subr.bf16.mxu0 0
        %787 = vmatpush1.bf16.msra.mxu0 %v762
        %788 = vmatprep.subr.bf16.mxu0 0
        %789 = vmatpush1.bf16.msra.mxu0 %v761
        %790 = vmatprep.subr.bf16.mxu0 0
        %791 = vmatpush1.bf16.msra.mxu0 %v760
        %792 = vmatprep.subr.bf16.mxu0 0
        %793 = vmatpush2.bf16.msra.mxu0 0
        %794 = vmatprep.subr.bf16.mxu0 0
        %795 = vmatpush2.bf16.msra.mxu0 0
        %796 = vmatprep.subr.bf16.mxu0 0
        %797 = vmatpush2.bf16.msra.mxu0 0
        %798 = vmatprep.subr.bf16.mxu0 0
        %799 = vmatpush2.bf16.msra.mxu0 0
        %800 = vmatprep.subr.bf16.mxu0 0
        %801 = vmatpush2.bf16.msra.mxu0 0
        %802 = vmatprep.subr.bf16.mxu0 0
        %803 = vmatpush2.bf16.msra.mxu0 0
        %804 = vmatprep.subr.bf16.mxu0 0
        %805 = vmatpush2.bf16.msra.mxu0 0
        %806 = vmatprep.subr.bf16.mxu0 0
        %807 = vmatpush2.bf16.msra.mxu0 0
        %808 = vmatprep.mubr.bf16.mxu0 0
        %809 = vmatmul.mubr.bf16.gmra.mxu0 %v716
        %v810 = vpop.f32.mrf.mxu0
        %v811 = vadd.f32 %v646, %v810
        %v812 = vpop.f32.mrf.mxu0
        %v813 = vpop.f32.mrf.mxu0
        %v814 = vadd.f32 %v649, %v813
        %v815 = vpop.f32.mrf.mxu0
        %816 = vmatprep.mubr.bf16.mxu0 0
        %817 = vmatmul.mubr.bf16.gmra.mxu0 %v717
        %v818 = vpop.f32.mrf.mxu0
        %v819 = vadd.f32 %v654, %v818
        %v820 = vpop.f32.mrf.mxu0
        %v821 = vpop.f32.mrf.mxu0
        %v822 = vadd.f32 %v657, %v821
        %v823 = vpop.f32.mrf.mxu0
        %824 = vmatprep.mubr.bf16.mxu0 0
        %825 = vmatmul.mubr.bf16.gmra.mxu0 %v718
        %v826 = vpop.f32.mrf.mxu0
        %v827 = vadd.f32 %v662, %v826
        %v828 = vpop.f32.mrf.mxu0
        %v829 = vpop.f32.mrf.mxu0
        %v830 = vadd.f32 %v665, %v829
        %v831 = vpop.f32.mrf.mxu0
        %832 = vmatprep.mubr.bf16.mxu0 0
        %833 = vmatmul.mubr.bf16.gmra.mxu0 %v719
        %v834 = vpop.f32.mrf.mxu0
        %v835 = vadd.f32 %v670, %v834
        %v836 = vpop.f32.mrf.mxu0
        %v837 = vpop.f32.mrf.mxu0
        %v838 = vadd.f32 %v673, %v837
        %v839 = vpop.f32.mrf.mxu0
        %840 = vmatprep.mubr.bf16.mxu0 0
        %841 = vmatmul.mubr.bf16.gmra.mxu0 %v720
        %v842 = vpop.f32.mrf.mxu0
        %v843 = vadd.f32 %v678, %v842
        %v844 = vpop.f32.mrf.mxu0
        %v845 = vpop.f32.mrf.mxu0
        %v846 = vadd.f32 %v681, %v845
        %v847 = vpop.f32.mrf.mxu0
        %848 = vmatprep.mubr.bf16.mxu0 0
        %849 = vmatmul.mubr.bf16.gmra.mxu0 %v721
        %v850 = vpop.f32.mrf.mxu0
        %v851 = vadd.f32 %v686, %v850
        %v852 = vpop.f32.mrf.mxu0
        %v853 = vpop.f32.mrf.mxu0
        %v854 = vadd.f32 %v689, %v853
        %v855 = vpop.f32.mrf.mxu0
        %856 = vdwg.mxu0
        %s857 = scalar_lea.vmem %s5, %s376
        %v858 = vld [vmem:[%s857] sm:$0x1]
        %v860 = vlaneseq
        %v861 = vshrl.u32 %v860, 7
        %v862 = vsub.s32 0, %v861
        %v863 = vrot.slane %v858, %v862
        %v865 = vadd.f32 %v811, %v863
        %v866 = vadd.f32 %v814, %v863
        %v867 = vadd.f32 %v819, %v863
        %v868 = vadd.f32 %v822, %v863
        %v869 = vadd.f32 %v827, %v863
        %v870 = vadd.f32 %v830, %v863
        %v871 = vadd.f32 %v835, %v863
        %v872 = vadd.f32 %v838, %v863
        %v873 = vadd.f32 %v843, %v863
        %v874 = vadd.f32 %v846, %v863
        %v875 = vadd.f32 %v851, %v863
        %v876 = vadd.f32 %v854, %v863
        %877 = vadd.xlane.f32.xlu0 %v865
        %v878 = vpop.xlane.xlu0 %877
        %879 = vadd.xlane.f32.xlu0 %v866
        %v880 = vpop.xlane.xlu0 %879
        %881 = vadd.xlane.f32.xlu0 %v867
        %v882 = vpop.xlane.xlu0 %881
        %883 = vadd.xlane.f32.xlu0 %v868
        %v884 = vpop.xlane.xlu0 %883
        %885 = vadd.xlane.f32.xlu0 %v869
        %v886 = vpop.xlane.xlu0 %885
        %887 = vadd.xlane.f32.xlu0 %v870
        %v888 = vpop.xlane.xlu0 %887
        %889 = vadd.xlane.f32.xlu0 %v871
        %v890 = vpop.xlane.xlu0 %889
        %891 = vadd.xlane.f32.xlu0 %v872
        %v892 = vpop.xlane.xlu0 %891
        %893 = vadd.xlane.f32.xlu0 %v873
        %v894 = vpop.xlane.xlu0 %893
        %895 = vadd.xlane.f32.xlu0 %v874
        %v896 = vpop.xlane.xlu0 %895
        %897 = vadd.xlane.f32.xlu0 %v875
        %v898 = vpop.xlane.xlu0 %897
        %899 = vadd.xlane.f32.xlu0 %v876
        %v900 = vpop.xlane.xlu0 %899
        %v901 = vrcp.pop 128.0
        %v902 = vmul.f32 %v878, %v901
        %v903 = vmul.f32 %v880, %v901
        %v904 = vmul.f32 %v882, %v901
        %v905 = vmul.f32 %v884, %v901
        %v906 = vmul.f32 %v886, %v901
        %v907 = vmul.f32 %v888, %v901
        %v908 = vmul.f32 %v890, %v901
        %v909 = vmul.f32 %v892, %v901
        %v910 = vmul.f32 %v894, %v901
        %v911 = vmul.f32 %v896, %v901
        %v912 = vmul.f32 %v898, %v901
        %v913 = vmul.f32 %v900, %v901
        %v914 = vsub.f32 %v865, %v902
        %v915 = vsub.f32 %v866, %v903
        %v916 = vsub.f32 %v867, %v904
        %v917 = vsub.f32 %v868, %v905
        %v918 = vsub.f32 %v869, %v906
        %v919 = vsub.f32 %v870, %v907
        %v920 = vsub.f32 %v871, %v908
        %v921 = vsub.f32 %v872, %v909
        %v922 = vsub.f32 %v873, %v910
        %v923 = vsub.f32 %v874, %v911
        %v924 = vsub.f32 %v875, %v912
        %v925 = vsub.f32 %v876, %v913
        %v926 = vmul.f32 %v914, %v914
        %v927 = vmul.f32 %v915, %v915
        %v928 = vmul.f32 %v916, %v916
        %v929 = vmul.f32 %v917, %v917
        %v930 = vmul.f32 %v918, %v918
        %v931 = vmul.f32 %v919, %v919
        %v932 = vmul.f32 %v920, %v920
        %v933 = vmul.f32 %v921, %v921
        %v934 = vmul.f32 %v922, %v922
        %v935 = vmul.f32 %v923, %v923
        %v936 = vmul.f32 %v924, %v924
        %v937 = vmul.f32 %v925, %v925
        %938 = vadd.xlane.f32.xlu0 %v926
        %v939 = vpop.xlane.xlu0 %938
        %940 = vadd.xlane.f32.xlu0 %v927
        %v941 = vpop.xlane.xlu0 %940
        %942 = vadd.xlane.f32.xlu0 %v928
        %v943 = vpop.xlane.xlu0 %942
        %944 = vadd.xlane.f32.xlu0 %v929
        %v945 = vpop.xlane.xlu0 %944
        %946 = vadd.xlane.f32.xlu0 %v930
        %v947 = vpop.xlane.xlu0 %946
        %948 = vadd.xlane.f32.xlu0 %v931
        %v949 = vpop.xlane.xlu0 %948
        %950 = vadd.xlane.f32.xlu0 %v932
        %v951 = vpop.xlane.xlu0 %950
        %952 = vadd.xlane.f32.xlu0 %v933
        %v953 = vpop.xlane.xlu0 %952
        %954 = vadd.xlane.f32.xlu0 %v934
        %v955 = vpop.xlane.xlu0 %954
        %956 = vadd.xlane.f32.xlu0 %v935
        %v957 = vpop.xlane.xlu0 %956
        %958 = vadd.xlane.f32.xlu0 %v936
        %v959 = vpop.xlane.xlu0 %958
        %960 = vadd.xlane.f32.xlu0 %v937
        %v961 = vpop.xlane.xlu0 %960
        %v962 = vmul.f32 %v939, %v901
        %v963 = vmul.f32 %v941, %v901
        %v964 = vmul.f32 %v943, %v901
        %v965 = vmul.f32 %v945, %v901
        %v966 = vmul.f32 %v947, %v901
        %v967 = vmul.f32 %v949, %v901
        %v968 = vmul.f32 %v951, %v901
        %v969 = vmul.f32 %v953, %v901
        %v970 = vmul.f32 %v955, %v901
        %v971 = vmul.f32 %v957, %v901
        %v972 = vmul.f32 %v959, %v901
        %v973 = vmul.f32 %v961, %v901
        %v974 = vadd.f32 %v962, 1e-05
        %v975 = vadd.f32 %v963, 1e-05
        %v976 = vadd.f32 %v964, 1e-05
        %v977 = vadd.f32 %v965, 1e-05
        %v978 = vadd.f32 %v966, 1e-05
        %v979 = vadd.f32 %v967, 1e-05
        %v980 = vadd.f32 %v968, 1e-05
        %v981 = vadd.f32 %v969, 1e-05
        %v982 = vadd.f32 %v970, 1e-05
        %v983 = vadd.f32 %v971, 1e-05
        %v984 = vadd.f32 %v972, 1e-05
        %v985 = vadd.f32 %v973, 1e-05
        %v986 = vrsqrt.pop %v974
        %v987 = vrsqrt.pop %v975
        %v988 = vrsqrt.pop %v976
        %v989 = vrsqrt.pop %v977
        %v990 = vrsqrt.pop %v978
        %v991 = vrsqrt.pop %v979
        %v992 = vrsqrt.pop %v980
        %v993 = vrsqrt.pop %v981
        %v994 = vrsqrt.pop %v982
        %v995 = vrsqrt.pop %v983
        %v996 = vrsqrt.pop %v984
        %v997 = vrsqrt.pop %v985
        %v998 = vmul.f32 %v914, %v986
        %v999 = vmul.f32 %v915, %v987
        %v1000 = vmul.f32 %v916, %v988
        %v1001 = vmul.f32 %v917, %v989
        %v1002 = vmul.f32 %v918, %v990
        %v1003 = vmul.f32 %v919, %v991
        %v1004 = vmul.f32 %v920, %v992
        %v1005 = vmul.f32 %v921, %v993
        %v1006 = vmul.f32 %v922, %v994
        %v1007 = vmul.f32 %v923, %v995
        %v1008 = vmul.f32 %v924, %v996
        %v1009 = vmul.f32 %v925, %v997
        %s1010 = scalar_lea.vmem %s6, %s376
        %v1011 = vld [vmem:[%s1010] sm:$0x1]
        %v1013 = vlaneseq
        %v1014 = vshrl.u32 %v1013, 7
        %v1015 = vsub.s32 0, %v1014
        %v1016 = vrot.slane %v1011, %v1015
        %v1018 = vmul.f32 %v998, %v1016
        %v1019 = vmul.f32 %v999, %v1016
        %v1020 = vmul.f32 %v1000, %v1016
        %v1021 = vmul.f32 %v1001, %v1016
        %v1022 = vmul.f32 %v1002, %v1016
        %v1023 = vmul.f32 %v1003, %v1016
        %v1024 = vmul.f32 %v1004, %v1016
        %v1025 = vmul.f32 %v1005, %v1016
        %v1026 = vmul.f32 %v1006, %v1016
        %v1027 = vmul.f32 %v1007, %v1016
        %v1028 = vmul.f32 %v1008, %v1016
        %v1029 = vmul.f32 %v1009, %v1016
        %s1030 = scalar_lea.vmem %s7, %s376
        %v1031 = vld [vmem:[%s1030] sm:$0x1]
        %v1033 = vlaneseq
        %v1034 = vshrl.u32 %v1033, 7
        %v1035 = vsub.s32 0, %v1034
        %v1036 = vrot.slane %v1031, %v1035
        %v1038 = vadd.f32 %v1018, %v1036
        %v1039 = vadd.f32 %v1019, %v1036
        %v1040 = vadd.f32 %v1020, %v1036
        %v1041 = vadd.f32 %v1021, %v1036
        %v1042 = vadd.f32 %v1022, %v1036
        %v1043 = vadd.f32 %v1023, %v1036
        %v1044 = vadd.f32 %v1024, %v1036
        %v1045 = vadd.f32 %v1025, %v1036
        %v1046 = vadd.f32 %v1026, %v1036
        %v1047 = vadd.f32 %v1027, %v1036
        %v1048 = vadd.f32 %v1028, %v1036
        %v1049 = vadd.f32 %v1029, %v1036
        %v1050 = vmax.f32 %v1038, 0.0
        %v1051 = vmax.f32 %v1039, 0.0
        %v1052 = vmax.f32 %v1040, 0.0
        %v1053 = vmax.f32 %v1041, 0.0
        %v1054 = vmax.f32 %v1042, 0.0
        %v1055 = vmax.f32 %v1043, 0.0
        %v1056 = vmax.f32 %v1044, 0.0
        %v1057 = vmax.f32 %v1045, 0.0
        %v1058 = vmax.f32 %v1046, 0.0
        %v1059 = vmax.f32 %v1047, 0.0
        %v1060 = vmax.f32 %v1048, 0.0
        %v1061 = vmax.f32 %v1049, 0.0
        %v1062 = vpack.c.bf16 %v1051, %v1050
        %v1063 = vpack.c.bf16 %v1053, %v1052
        %v1064 = vpack.c.bf16 %v1055, %v1054
        %v1065 = vpack.c.bf16 %v1057, %v1056
        %v1066 = vpack.c.bf16 %v1059, %v1058
        %v1067 = vpack.c.bf16 %v1061, %v1060
        %v1074 = vunpack.c.l.b16 %v1062
        %v1075 = vunpack.c.h.b16 %v1062
        %v1076 = vunpack.c.l.b16 %v1063
        %v1077 = vunpack.c.h.b16 %v1063
        %v1078 = vunpack.c.l.b16 %v1064
        %v1079 = vunpack.c.h.b16 %v1064
        %v1080 = vunpack.c.l.b16 %v1065
        %v1081 = vunpack.c.h.b16 %v1065
        %v1082 = vunpack.c.l.b16 %v1066
        %v1083 = vunpack.c.h.b16 %v1066
        %v1084 = vunpack.c.l.b16 %v1067
        %v1085 = vunpack.c.h.b16 %v1067
        %v1086 = vpack.c.b16 %v1074, %v1074
        %v1087 = vpack.c.b16 %v1075, %v1075
        %v1088 = vpack.c.b16 %v1076, %v1076
        %v1089 = vpack.c.b16 %v1077, %v1077
        %v1090 = vpack.c.b16 %v1078, %v1078
        %v1091 = vpack.c.b16 %v1079, %v1079
        %v1092 = vpack.c.b16 %v1080, %v1080
        %v1093 = vpack.c.b16 %v1081, %v1081
        %v1094 = vpack.c.b16 %v1082, %v1082
        %v1095 = vpack.c.b16 %v1083, %v1083
        %v1096 = vpack.c.b16 %v1084, %v1084
        %v1097 = vpack.c.b16 %v1085, %v1085
        %1110 = vst [vmem:[%s371] sm:$0xf] %v1086
        %1111 = vst [vmem:[%s371 + $0x4] sm:$0xf] %v1087
        %1112 = vst [vmem:[%s371 + $0x8] sm:$0xf] %v1088
        %1113 = vst [vmem:[%s371 + $0xc] sm:$0xf] %v1089
        %1114 = vst [vmem:[%s371 + $0x10] sm:$0xf] %v1090
        %1115 = vst [vmem:[%s371 + $0x14] sm:$0xf] %v1091
        %1116 = vst [vmem:[%s371 + $0x18] sm:$0xf] %v1092
        %1117 = vst [vmem:[%s371 + $0x1c] sm:$0xf] %v1093
        %1118 = vst [vmem:[%s371 + $0x20] sm:$0xf] %v1094
        %1119 = vst [vmem:[%s371 + $0x24] sm:$0xf] %v1095
        %1120 = vst [vmem:[%s371 + $0x28] sm:$0xf] %v1096
        %1121 = vst [vmem:[%s371 + $0x2c] sm:$0xf] %v1097
        %s1122 = sand.u32 %s198, 1
        %s1123 = scalar_lea.sflag [#allocation6], %s1122
        %s1124 = sand.u32 %s198, 1
        %s1125 = smul.addr %s1124, 48
        %s1126 = scalar_lea.vmem [#allocation12], %s1125
        // Predicated region
        $region65: #{tpu_custom_call.1} parent=47 // pred_check
          %p1127 = pneg %p208
        $region66: #{tpu_custom_call.1} parent=47 // pred_check_branch
          %1129 = sbr.rel (%p1127) target = $region68
        $region67: #{tpu_custom_call.1} parent=47 // pred_region
          %s1130 = smul.u32 12, %s33
          %s1132 = ssub.s32 768, 768
          %1133 = vsyncadd %s1123, %s1132
          %s1134 = smul.addr %s1130, 64
          %s1135 = scalar_lea.hbm %s8, %s1134
          %s1136 = sshll.u32 %s1126, 4
          %s1137 = int_to_ptr.vmem [resolvable:$true] %s1136
          %1142 = dma.vmem_to_hbm [thread:$0]  %s1137, 768, %s1135, %s1123, 64, 64, 4
        $region68: #{tpu_custom_call.1} parent=47 // pred_fallthru
          _
      $region48: #{tpu_custom_call.1} parent=5 // pred_fallthru
        _
      %p1143 = scmp.le.s32.totalorder 2, %s28
      // Predicated region
      $region69: #{tpu_custom_call.1} parent=5 // pred_check
        %p1144 = pneg %p1143
      $region70: #{tpu_custom_call.1} parent=5 // pred_check_branch
        %1146 = sbr.rel (%p1144) target = $region72
      $region71: #{tpu_custom_call.1} parent=5 // pred_region
        %s1147 = ssub.s32 %s28, 2
        // Predicated region
        $region73: #{tpu_custom_call.1} parent=71 // pred_check
          %p1148 = pneg %p214
        $region74: #{tpu_custom_call.1} parent=71 // pred_check_branch
          %1150 = sbr.rel (%p1148) target = $region76
        $region75: #{tpu_custom_call.1} parent=71 // pred_region
          %s1151 = sand.u32 %s199, 1
          %s1152 = scalar_lea.sflag [#allocation6], %s1151
          %s1153 = sand.u32 %s199, 1
          %s1154 = smul.addr %s1153, 48
          %s1155 = scalar_lea.vmem [#allocation12], %s1154
          %1156 = dma.done %s1152, 768
        $region76: #{tpu_custom_call.1} parent=71 // pred_fallthru
          _
      $region72: #{tpu_custom_call.1} parent=5 // pred_fallthru
        _
    $region6: #{tpu_custom_call.1} parent=1 // loop_footer
      %s32 = sadd.s32 1, %s28
    $region7: #{tpu_custom_call.1} parent=1 // loop_footer_branch
      %27 = sbr.rel target = $region3
    $region8: #{tpu_custom_call.1} parent=1 // loop_exit
      _
    %1157 = vsyncpa [#allocation5], 1
    %s1158 = scalar_lea.sflag [#allocation5], 1
    %1159 = vsyncpa %s1158, 1
    %1160 = vsyncpa [#allocation8], 1
    %s1161 = scalar_lea.sflag [#allocation8], 1
    %1162 = vsyncpa %s1161, 1
    %1163 = vsyncpa [#allocation11], 1
    %1164 = vsyncpa [#allocation6], 1
    %s1165 = scalar_lea.sflag [#allocation6], 1
    %1166 = vsyncpa %s1165, 1

</llo_original>
